<compile_context>
chip_gen: v7x
topology: tpu7x:2x2x1
jax: 0.10.0
libtpu: 0.0.40
codegen_flags: <defaults>
</compile_context>

<pallas_src>
import jax
import jax.numpy as jnp
from jax.experimental import pallas as pl
from jax.experimental.pallas import tpu as pltpu


def _clip_text_embed_kernel(ids_ref,       # SMEM (B*S_pad,) int32  (scalar prefetch)
                            tok_hbm_ref,   # HBM  (V, D)            (memory_space=ANY)
                            pos_ref,       # VMEM (1, tq, D) position tile
                            out_ref,       # VMEM (1, tq, D) output tile
                            rows_ref,      # VMEM (tq, D) scratch: gathered token rows
                            sems):         # DMA semaphores, shape (tq,)
    b = pl.program_id(0)
    s = pl.program_id(1)
    tq = out_ref.shape[1]
    s_pad = pl.num_programs(1) * tq
    base = b * s_pad + s * tq

    # Issue one row DMA per token id in this tile; keep all tq copies in flight.
    @pl.loop(0, tq)
    def _issue(i):
        row = ids_ref[base + i]                                   # SMEM scalar read
        pltpu.make_async_copy(tok_hbm_ref.at[row],                # (D,) row in HBM
                              rows_ref.at[i],                     # (D,) row in VMEM
                              sems.at[i]).start()

    # Wait for all row DMAs of this tile.
    @pl.loop(0, tq)
    def _wait(i):
        pltpu.make_async_copy(tok_hbm_ref.at[0], rows_ref.at[i], sems.at[i]).wait()

    # Elementwise add of the position tile (one VPU pass), single lane-dense store.
    out_ref[0] = (rows_ref[...] + pos_ref[0]).astype(out_ref.dtype)


def clip_text_embeddings(input_ids, token_embedding, position_embedding,
                         position_ids=None, *, seq_tile=128):
    """input_ids: (B, S) int; token_embedding: (V, D); position_embedding: (P, D);
    optional position_ids: (1, S) or (B, S). Returns (B, S, D)."""
    B, S = input_ids.shape
    V, D = token_embedding.shape
    P, _ = position_embedding.shape

    if S > P:
        raise ValueError(
            f"Sequence length must be less than max_position_embeddings "
            f"(got sequence length: {S} and max_position_embeddings: {P})")

    def round_up(x, m):
        return (x + m - 1) // m * m

    # Sequence tiling: a single tile for short sequences (CLIP S<=77), else
    # 128-row tiles.  S is padded up to a sublane multiple; padding is sliced off.
    if S <= seq_tile:
        tq = round_up(S, 8)
        s_pad = tq
    else:
        tq = seq_tile
        s_pad = round_up(S, tq)
    n_s = s_pad // tq

    # Ids are addressing data -> scalar path (SMEM).  Clamp so the row DMAs can
    # never go out of bounds (PyTorch would raise on OOB ids instead).
    ids = jnp.clip(input_ids.astype(jnp.int32), 0, V - 1)
    if s_pad != S:
        ids = jnp.pad(ids, ((0, 0), (0, s_pad - S)))
    ids_flat = ids.reshape(B * s_pad)

    # Position-embedding slab.
    if position_ids is None:
        # Default arange path: no gather at all, just the leading S rows.
        pos_slab = position_embedding[:S]
        if s_pad != S:
            pos_slab = jnp.pad(pos_slab, ((0, s_pad - S), (0, 0)))
        pos_slab = pos_slab[None]                        # (1, s_pad, D)
    else:
        # Rare fallback: arbitrary position ids.
        # TODO(synk): gather these rows in-kernel via DMA as well instead of a
        # wrapper-side gather (CLIP always uses the arange default).
        pids = jnp.clip(position_ids.astype(jnp.int32), 0, P - 1)
        pids = jnp.broadcast_to(pids, (B, S))
        pos_slab = jnp.take(position_embedding, pids.reshape(-1),
                            axis=0).reshape(B, S, D)
        if s_pad != S:
            pos_slab = jnp.pad(pos_slab, ((0, 0), (0, s_pad - S), (0, 0)))
    pos_b = pos_slab.shape[0]

    out_dtype = token_embedding.dtype
    itemsize = jnp.dtype(out_dtype).itemsize
    cost = pl.CostEstimate(
        flops=B * S * D,                                  # one add per element
        transcendentals=0,
        bytes_accessed=(2 * B * s_pad * D + pos_b * s_pad * D) * itemsize)

    grid_spec = pltpu.PrefetchScalarGridSpec(
        num_scalar_prefetch=1,                            # ids_flat -> SMEM
        grid=(B, n_s),
        in_specs=[
            # Token table stays in HBM; rows are DMA-gathered in the kernel.
            pl.BlockSpec(memory_space=pl.ANY),
            # Position slab tile selected directly by index_map (no gather).
            pl.BlockSpec((1, tq, D),
                         lambda b, s, ids: (b if pos_b > 1 else 0, s, 0)),
        ],
        out_specs=pl.BlockSpec((1, tq, D), lambda b, s, ids: (b, s, 0)),
        scratch_shapes=[
            pltpu.VMEM((tq, D), out_dtype),
            pltpu.SemaphoreType.DMA((tq,)),
        ],
    )

    out = pl.pallas_call(
        _clip_text_embed_kernel,
        out_shape=jax.ShapeDtypeStruct((B, s_pad, D), out_dtype),
        grid_spec=grid_spec,
        compiler_params=pltpu.CompilerParams(
            dimension_semantics=("parallel", "parallel")),
        cost_estimate=cost,
    )(ids_flat, token_embedding, pos_slab)

    if s_pad != S:
        out = out[:, :S, :]
    return out


if __name__ == "__main__":
    # Small synthetic config consistent with CLIPTextConfig fields used.
    vocab_size = 64
    max_position_embeddings = 16
    hidden_size = 32          # embed_dim
    batch = 2
    seq_len = 8               # <= max_position_embeddings

    key = jax.random.PRNGKey(0)
    k_tok, k_pos, k_ids = jax.random.split(key, 3)

    # nn.Embedding default init is N(0, 1).
    token_embedding = jax.random.normal(
        k_tok, (vocab_size, hidden_size), jnp.float32)
    position_embedding = jax.random.normal(
        k_pos, (max_position_embeddings, hidden_size), jnp.float32)

    input_ids = jax.random.randint(
        k_ids, (batch, seq_len), 0, vocab_size, jnp.int32)

    # Default (arange position_ids) path.
    out = clip_text_embeddings(input_ids, token_embedding, position_embedding)
    out = jax.block_until_ready(out)
    ref = (jnp.take(token_embedding, input_ids, axis=0)
           + position_embedding[:seq_len][None])
    assert out.shape == (batch, seq_len, hidden_size)
    assert jnp.allclose(out, ref, atol=1e-5, rtol=1e-5), "mismatch vs reference"

    # Padded-sequence (non multiple of 8) + explicit position_ids fallback path.
    ids2 = input_ids[:, :7]
    pos_ids2 = jnp.arange(7, dtype=jnp.int32)[::-1][None, :]
    out2 = clip_text_embeddings(ids2, token_embedding, position_embedding,
                                position_ids=pos_ids2)
    out2 = jax.block_until_ready(out2)
    ref2 = (jnp.take(token_embedding, ids2, axis=0)
            + jnp.take(position_embedding, pos_ids2[0], axis=0)[None])
    assert out2.shape == (batch, 7, hidden_size)
    assert jnp.allclose(out2, ref2, atol=1e-5, rtol=1e-5), "mismatch (fallback)"

    print("KERNEL_OK")
</pallas_src>

<mosaic_0001>
module attributes {stable_mosaic.version = 11 : i64} {
  func.func @_clip_text_embed_kernel(%arg0: i32, %arg1: i32, %arg2: memref<16xi32, #tpu.memory_space<smem>>, %arg3: memref<64x32xf32, #tpu.memory_space<any>>, %arg4: memref<1x8x32xf32, #tpu.memory_space<vmem>>, %arg5: memref<1x8x32xf32, #tpu.memory_space<vmem>>, %arg6: memref<8x32xf32, #tpu.memory_space<vmem>>, %arg7: memref<8x!tpu.dma_semaphore, #tpu.memory_space<semaphore_mem>>) attributes {dimension_semantics = [#tpu.dimension_semantics<parallel>, #tpu.dimension_semantics<parallel>], iteration_bounds = array<i64: 2, 1>, scalar_prefetch = 1 : i64, scratch_operands = 2 : i64, tpu.core_type = #tpu.core_type<tc>, window_params = [{}, {transform_indices = @transform_1, window_bounds = array<i64: 1, 8, 32>}, {transform_indices = @transform_2, window_bounds = array<i64: 1, 8, 32>}]} {
    %c8_i32 = arith.constant 8 : i32
    %0 = arith.muli %arg0, %c8_i32 : i32
    %c8_i32_0 = arith.constant 8 : i32
    %1 = arith.muli %arg1, %c8_i32_0 : i32
    %2 = arith.addi %0, %1 : i32
    %c0_i32 = arith.constant 0 : i32
    %c8_i32_1 = arith.constant 8 : i32
    %3 = arith.addi %c0_i32, %c8_i32_1 : i32
    %c1_i32 = arith.constant 1 : i32
    scf.for %arg8 = %c0_i32 to %3 step %c1_i32  : i32 {
      %c1_i32_14 = arith.constant 1 : i32
      %12 = arith.muli %arg8, %c1_i32_14 : i32
      %c0_i32_15 = arith.constant 0 : i32
      %13 = arith.addi %c0_i32_15, %12 : i32
      %14 = arith.addi %2, %13 : i32
      %15 = arith.index_cast %14 : i32 to index
      %16 = memref.load %arg2[%15] : memref<16xi32, #tpu.memory_space<smem>>
      %c0_i32_16 = arith.constant 0 : i32
      %17 = tpu.memref_slice %arg3[%16, %c0_i32_16] : memref<64x32xf32, #tpu.memory_space<any>> -> memref<1x32xf32, #tpu.memory_space<any>>
      %18 = tpu.memref_squeeze %17 : memref<1x32xf32, #tpu.memory_space<any>> -> memref<32xf32, #tpu.memory_space<any>>
      %c0_i32_17 = arith.constant 0 : i32
      %19 = tpu.memref_slice %arg6[%13, %c0_i32_17] : memref<8x32xf32, #tpu.memory_space<vmem>> -> memref<1x32xf32, #tpu.memory_space<vmem>>
      %20 = tpu.memref_squeeze %19 : memref<1x32xf32, #tpu.memory_space<vmem>> -> memref<32xf32, #tpu.memory_space<vmem>>
      %21 = tpu.memref_slice %arg7[%13] : memref<8x!tpu.dma_semaphore, #tpu.memory_space<semaphore_mem>> -> memref<1x!tpu.dma_semaphore, #tpu.memory_space<semaphore_mem>>
      %22 = tpu.memref_squeeze %21 : memref<1x!tpu.dma_semaphore, #tpu.memory_space<semaphore_mem>> -> memref<!tpu.dma_semaphore, #tpu.memory_space<semaphore_mem>>
      tpu.enqueue_dma source(%18 : memref<32xf32, #tpu.memory_space<any>>) target(%20 : memref<32xf32, #tpu.memory_space<vmem>>) target_semaphore(%22 : memref<!tpu.dma_semaphore, #tpu.memory_space<semaphore_mem>>)
    }
    %c8_i32_2 = arith.constant 8 : i32
    %c0_i32_3 = arith.constant 0 : i32
    %c8_i32_4 = arith.constant 8 : i32
    %4 = arith.addi %c0_i32_3, %c8_i32_4 : i32
    %c1_i32_5 = arith.constant 1 : i32
    scf.for %arg8 = %c0_i32_3 to %4 step %c1_i32_5  : i32 {
      %c1_i32_14 = arith.constant 1 : i32
      %12 = arith.muli %arg8, %c1_i32_14 : i32
      %c0_i32_15 = arith.constant 0 : i32
      %13 = arith.addi %c0_i32_15, %12 : i32
      %c0_i32_16 = arith.constant 0 : i32
      %c0_i32_17 = arith.constant 0 : i32
      %14 = tpu.memref_slice %arg3[%c0_i32_16, %c0_i32_17] : memref<64x32xf32, #tpu.memory_space<any>> -> memref<1x32xf32, #tpu.memory_space<any>>
      %15 = tpu.memref_squeeze %14 : memref<1x32xf32, #tpu.memory_space<any>> -> memref<32xf32, #tpu.memory_space<any>>
      %c0_i32_18 = arith.constant 0 : i32
      %16 = tpu.memref_slice %arg6[%13, %c0_i32_18] : memref<8x32xf32, #tpu.memory_space<vmem>> -> memref<1x32xf32, #tpu.memory_space<vmem>>
      %17 = tpu.memref_squeeze %16 : memref<1x32xf32, #tpu.memory_space<vmem>> -> memref<32xf32, #tpu.memory_space<vmem>>
      %18 = tpu.memref_slice %arg7[%13] : memref<8x!tpu.dma_semaphore, #tpu.memory_space<semaphore_mem>> -> memref<1x!tpu.dma_semaphore, #tpu.memory_space<semaphore_mem>>
      %19 = tpu.memref_squeeze %18 : memref<1x!tpu.dma_semaphore, #tpu.memory_space<semaphore_mem>> -> memref<!tpu.dma_semaphore, #tpu.memory_space<semaphore_mem>>
      tpu.wait_dma2 semaphore(%19 : memref<!tpu.dma_semaphore, #tpu.memory_space<semaphore_mem>>) src(%15 : memref<32xf32, #tpu.memory_space<any>>) dst(%17 : memref<32xf32, #tpu.memory_space<vmem>>)
    }
    %c8_i32_6 = arith.constant 8 : i32
    %c0 = arith.constant 0 : index
    %c0_7 = arith.constant 0 : index
    %5 = vector.load %arg6[%c0, %c0_7] : memref<8x32xf32, #tpu.memory_space<vmem>>, vector<8x32xf32>
    %c0_8 = arith.constant 0 : index
    %c0_9 = arith.constant 0 : index
    %c0_10 = arith.constant 0 : index
    %6 = vector.load %arg4[%c0_8, %c0_9, %c0_10] : memref<1x8x32xf32, #tpu.memory_space<vmem>>, vector<1x8x32xf32>
    %7 = vector.shape_cast %6 : vector<1x8x32xf32> to vector<8x32xf32>
    %8 = arith.addf %5, %7 : vector<8x32xf32>
    %c0_11 = arith.constant 0 : index
    %c0_12 = arith.constant 0 : index
    %c0_13 = arith.constant 0 : index
    %9 = vector.load %arg5[%c0_11, %c0_12, %c0_13] : memref<1x8x32xf32, #tpu.memory_space<vmem>>, vector<1x8x32xf32>
    %10 = vector.shape_cast %9 : vector<1x8x32xf32> to vector<8x32xf32>
    %11 = vector.shape_cast %8 : vector<8x32xf32> to vector<1x8x32xf32>
    tpu.vector_store %arg5[%c0_11, %c0_12, %c0_13], %11 {strides = array<i32>} : memref<1x8x32xf32, #tpu.memory_space<vmem>>, vector<1x8x32xf32>,
    return
  }
  func.func @transform_1(%arg0: i32, %arg1: i32, %arg2: memref<16xi32, #tpu.memory_space<smem>>) -> (i32, i32, i32) {
    %c0_i32 = arith.constant 0 : i32
    %c0_i32_0 = arith.constant 0 : i32
    %c0_i32_1 = arith.constant 0 : i32
    return %c0_i32, %arg1, %c0_i32_0 : i32, i32, i32
  }
  func.func @transform_2(%arg0: i32, %arg1: i32, %arg2: memref<16xi32, #tpu.memory_space<smem>>) -> (i32, i32, i32) {
    %c0_i32 = arith.constant 0 : i32
    %c0_i32_0 = arith.constant 0 : i32
    return %arg0, %arg1, %c0_i32 : i32, i32, i32
  }
}

</mosaic_0001>

<llo_original>
// kernel: tpu_custom_call.1
$region0: #{tpu_custom_call.1}
  #allocation0 [shape = 'u32[]', space=smem, size = 0x4, offset = 0x4, fixed_abs, tag = 'smem constant byte address 0x4 - core index']
  #allocation1 [shape = 'u32[144,128]{1,0:T(1,128)}', space=vmem, size = 0x12000, scoped, tag = 'internal scratch']
  #allocation2 [shape = 'f32[8,32]{1,0:T(8,128)}', space=vmem, size = 0x1000, scoped, tag = 'scratch operand']
  #allocation3 [shape = 's32[8]{0}', space=sflag, size = 0x20, scoped, tag = 'scratch operand']
  #allocation4 [shape = 's32[1]{0}', space=sflag, size = 0x4, scoped, tag = 'scoped memory for tpu_custom_call.1']
  #allocation5 [shape = 'u8[512]{0}', space=smem, size = 0x200, scoped, tag = 'prefetched SMEM operand 0']
  #allocation8 [shape = 's32[]', space=sflag, size = 0x4, offset = 0, fixed_abs, tag = 'sflag constant byte address 0x0 - dummy sync flag']
  %s0 = inlined_call_operand.vmem [shape: s32[16], index: 0, kind: input, shape index: {}]
  %s1 = inlined_call_operand.vmem [shape: f32[64,32], index: 1, kind: input, shape index: {}]
  %s2 = inlined_call_operand.vmem [shape: f32[1,8,32], index: 2, kind: input, shape index: {}]
  %s3 = inlined_call_operand.hbm [shape: f32[2,8,32], index: 3, kind: output, shape index: {}]
  %s4 = sld [smem:[#allocation0]]
  $region81: #{tpu_custom_call.1} parent=0
    _
  %s6 = ssub.s32 1, %s4
  %s7 = scalar_select 0, %s6, %s4
  %s8 = sshll.u32 %s0, 4
  %s9 = int_to_ptr.vmem [resolvable:$true] %s8
  %11 = dma.vmem_to_smem %s9, 16, [#allocation5], [#allocation4]
  %12 = dma.done [#allocation4], 16
  %13 = sfence
  $region1: #{tpu_custom_call.1} parent=0
    #allocation6 [shape = 'u8[8192]{0}', space=vmem, size = 0x2000, scoped, tag = 'output window, operand 0']
    #allocation7 [shape = 's32[2]{0}', space=sflag, size = 0x8, scoped, tag = 'scoped memory for tpu_custom_call.1']
    %14 = vsyncpa [#allocation7], 0
    %s15 = scalar_lea.sflag [#allocation7], 1
    %16 = vsyncpa %s15, 0
    loop: start=0, step=1, limit=4
    $region2: #{tpu_custom_call.1} parent=1 // loop_pre_header
      _
    $region3: #{tpu_custom_call.1} parent=1 // loop_header
      %s18 = sphi 0, %s22
      %p19 = scmp.ge.s32.totalorder %s18, 4
      %s25 = sphi 0, %s37
      %s26 = sphi 0, %s33
      %s27 = sphi 0, %s25
      %s28 = sphi 0, %s26
      %s29 = sphi 0, %s27
      %s30 = sphi 0, %s28
      %s40 = sphi 0, %s42
      %s43 = sphi 0, %s40
      %s44 = sphi 0, %s43
      %s60 = sphi 0, %s44
      %s68 = sphi 0, %s70
      %s71 = sphi 0, %s68
      %s72 = sphi 0, %s71
      %s88 = sphi 0, %s72
    $region4: #{tpu_custom_call.1} parent=1 // loop_header_branch
      %21 = sbr.rel (%p19) target = $region8
    $region5: #{tpu_custom_call.1} parent=1 // loop_body
      %s23 = ssub.s32 %s18, 1
      %s24 = ssub.s32 %s18, 2
      %s31 = sadd.s32 1, %s26
      %p32 = scmp.ge.s32.totalorder %s31, 1
      %s33 = scalar_select %p32, 0, %s31
      %s34 = sadd.s32 1, %s25
      %s35 = scalar_select %p32, %s34, %s25
      %p36 = scmp.ge.s32.totalorder %s35, 2
      %s37 = scalar_select %p36, 0, %s35
      %s38 = ssub.s32 %s26, %s33
      %p39 = scmp.eq.s32.totalorder %s38, 0
      %s41 = sadd.s32 %s40, 1
      %s42 = scalar_select %p39, %s40, %s41
      %p45 = pneg %p39
      %p46 = scmp.eq.s32.totalorder %s18, 1
      %p47 = por %p45, %p46
      %p48 = scmp.ne.s32.totalorder %s40, %s43
      %p49 = scmp.eq.s32.totalorder %s18, 0
      %p50 = por %p48, %p49
      %p51 = scmp.ne.s32.totalorder %s40, %s43
      %p52 = scmp.eq.s32.totalorder %s23, 1
      %p53 = por %p51, %p52
      %p54 = scmp.ne.s32.totalorder %s43, %s44
      %p55 = scmp.eq.s32.totalorder %s23, 0
      %p56 = por %p54, %p55
      %p57 = scmp.ne.s32.totalorder %s43, %s44
      %p58 = scmp.eq.s32.totalorder %s24, 1
      %p59 = por %p57, %p58
      %p61 = scmp.ne.s32.totalorder %s44, %s60
      %p62 = scmp.eq.s32.totalorder %s24, 0
      %p63 = por %p61, %p62
      %s64 = ssub.s32 %s25, %s37
      %s65 = ssub.s32 %s26, %s33
      %s66 = sor.u32 %s64, %s65
      %p67 = scmp.eq.s32.totalorder %s66, 0
      %s69 = sadd.s32 %s68, 1
      %s70 = scalar_select %p67, %s68, %s69
      %p73 = pneg %p67
      %p74 = scmp.eq.s32.totalorder %s18, 1
      %p75 = por %p73, %p74
      %p76 = scmp.ne.s32.totalorder %s68, %s71
      %p77 = scmp.eq.s32.totalorder %s18, 0
      %p78 = por %p76, %p77
      %p79 = scmp.ne.s32.totalorder %s68, %s71
      %p80 = scmp.eq.s32.totalorder %s23, 1
      %p81 = por %p79, %p80
      %p82 = scmp.ne.s32.totalorder %s71, %s72
      %p83 = scmp.eq.s32.totalorder %s23, 0
      %p84 = por %p82, %p83
      %p85 = scmp.ne.s32.totalorder %s71, %s72
      %p86 = scmp.eq.s32.totalorder %s24, 1
      %p87 = por %p85, %p86
      %p89 = scmp.ne.s32.totalorder %s72, %s88
      %p90 = scmp.eq.s32.totalorder %s24, 0
      %p91 = por %p89, %p90
      %p92 = scmp.le.s32.totalorder 1, %s18
      %p93 = scmp.lt.s32.totalorder %s18, 3
      %p94 = pnand %p92, %p93
      %p95 = pneg %p94
      // Predicated region
      $region9: #{tpu_custom_call.1} parent=5 // pred_check
        _
      $region10: #{tpu_custom_call.1} parent=5 // pred_check_branch
        %97 = sbr.rel (%p94) target = $region12
      $region11: #{tpu_custom_call.1} parent=5 // pred_region
        %s98 = ssub.s32 %s18, 1
        // Predicated region
        $region13: #{tpu_custom_call.1} parent=11 // pred_check
          %p99 = pneg %p56
        $region14: #{tpu_custom_call.1} parent=11 // pred_check_branch
          %101 = sbr.rel (%p99) target = $region16
        $region15: #{tpu_custom_call.1} parent=11 // pred_region
          %p102 = scmp.lt.s32.totalorder %s28, 0
          %s103 = scalar_select %p102, %s28, 0
          %s104 = smul.addr %s103, 8
          %s105 = scalar_lea.vmem %s2, %s104
        $region16: #{tpu_custom_call.1} parent=11 // pred_fallthru
          _
      $region12: #{tpu_custom_call.1} parent=5 // pred_fallthru
        _
      %p106 = scmp.lt.s32.totalorder %s18, 2
      // Predicated region
      $region17: #{tpu_custom_call.1} parent=5 // pred_check
        %p107 = pneg %p106
      $region18: #{tpu_custom_call.1} parent=5 // pred_check_branch
        %109 = sbr.rel (%p107) target = $region20
      $region19: #{tpu_custom_call.1} parent=5 // pred_region
        _
      $region20: #{tpu_custom_call.1} parent=5 // pred_fallthru
        _
      %p110 = scmp.le.s32.totalorder 1, %s18
      %p111 = scmp.lt.s32.totalorder %s18, 3
      %p112 = pnand %p110, %p111
      %p113 = pneg %p112
      // Predicated region
      $region21: #{tpu_custom_call.1} parent=5 // pred_check
        _
      $region22: #{tpu_custom_call.1} parent=5 // pred_check_branch
        %115 = sbr.rel (%p112) target = $region24
      $region23: #{tpu_custom_call.1} parent=5 // pred_region
        %s116 = ssub.s32 %s18, 1
        %p117 = scmp.lt.s32.totalorder %s28, 0
        %s118 = scalar_select %p117, %s28, 0
        %s119 = smul.addr %s118, 8
        %s120 = scalar_lea.vmem %s2, %s119
        %p121 = pneg %p56
        %p122 = pneg %p53
        %p123 = pneg %p84
        %p124 = pneg %p81
        %s125 = sand.u32 %s71, 1
        %s126 = scalar_lea.sflag [#allocation7], %s125
        %s127 = sand.u32 %s71, 1
        %s128 = smul.addr %s127, 8
        %s129 = scalar_lea.vmem [#allocation6], %s128
        %p130 = scmp.lt.s32.totalorder %s28, 0
        %s131 = scalar_select %p130, %s28, 0
        %s132 = smul.addr %s131, 8
        %s133 = scalar_lea.vmem %s2, %s132
        %s134 = smul.u32 %s27, 8
        %s135 = smul.u32 %s28, 8
        %s136 = sadd.s32 %s134, %s135
        loop: start=0, step=1, limit=8
        $region25: #{tpu_custom_call.1} parent=23 // loop_pre_header
          _
        $region26: #{tpu_custom_call.1} parent=23 // loop_header
          %s138 = sphi 0, %s142
          %p139 = scmp.ge.s32.totalorder %s138, 8
        $region27: #{tpu_custom_call.1} parent=23 // loop_header_branch
          %141 = sbr.rel (%p139) target = $region31
        $region28: #{tpu_custom_call.1} parent=23 // loop_body
          %s143 = sadd.s32 %s136, %s138
          %s144 = sld [smem:[#allocation5 + %s143]]
          %s145 = scalar_lea.vmem %s1, %s144
          %s146 = scalar_lea.vmem [#allocation2], %s138
          %s147 = scalar_lea.sflag [#allocation3], %s138
          %p149 = scmp.lt.u32.totalorder 1, 8
          %p150 = pneg %p149
          // Predicated region
          $region32: #{tpu_custom_call.1} parent=28 // pred_check
            _
          $region33: #{tpu_custom_call.1} parent=28 // pred_check_branch
            %152 = sbr.rel (%p149) target = $region35
          $region34: #{tpu_custom_call.1} parent=28 // pred_region
            %s167 = sand.u32 1, 7
            %p168 = scmp.eq.s32.totalorder %s167, 0
            %p169 = pneg %p168
            // Predicated region
            $region47: #{tpu_custom_call.1} parent=34 // pred_check
              _
            $region48: #{tpu_custom_call.1} parent=34 // pred_check_branch
              %171 = sbr.rel (%p168) target = $region50
            $region49: #{tpu_custom_call.1} parent=34 // pred_region
              %s172 = sand.u32 1, 7
              %s173 = ssub.s32 1, %s172
              %s174 = scalar_lea.vmem %s145, %s173
              %s175 = ssub.s32 1, %s172
              %s176 = scalar_lea.vmem %s146, %s175 [#allocation2]
              %s177 = sshllo.u32 0, %s172
              loop: start=0, step=1, limit=1
              $region51: #{tpu_custom_call.1} parent=49 // loop_pre_header
                _
              $region52: #{tpu_custom_call.1} parent=49 // loop_header
                %s179 = sphi 0, %s183
                %p180 = scmp.ge.s32.totalorder %s179, 1
                %s184 = sphi %s174, %s174
                %s185 = sphi %s176, %s176
              $region53: #{tpu_custom_call.1} parent=49 // loop_header_branch
                %182 = sbr.rel (%p180) target = $region57
              $region54: #{tpu_custom_call.1} parent=49 // loop_body
                %v186 = vld [vmem:[%s184] sm:%s177]
                %187 = vst [vmem:[%s185] sm:%s177] %v186
              $region55: #{tpu_custom_call.1} parent=49 // loop_footer
                %s183 = sadd.s32 1, %s179
              $region56: #{tpu_custom_call.1} parent=49 // loop_footer_branch
                %178 = sbr.rel target = $region52
              $region57: #{tpu_custom_call.1} parent=49 // loop_exit
                _
            $region50: #{tpu_custom_call.1} parent=34 // pred_fallthru
              _
          $region35: #{tpu_custom_call.1} parent=28 // pred_fallthru
            _
          // Predicated region
          $region36: #{tpu_custom_call.1} parent=28 // pred_check
            %p153 = pneg %p149
          $region37: #{tpu_custom_call.1} parent=28 // pred_check_branch
            %155 = sbr.rel (%p153) target = $region39
          $region38: #{tpu_custom_call.1} parent=28 // pred_region
            %s156 = sshllo.u32 0, 1
            loop: start=0, step=1, limit=1
            $region40: #{tpu_custom_call.1} parent=38 // loop_pre_header
              _
            $region41: #{tpu_custom_call.1} parent=38 // loop_header
              %s158 = sphi 0, %s162
              %p159 = scmp.ge.s32.totalorder %s158, 1
              %s163 = sphi %s145, %s145
              %s164 = sphi %s146, %s146
            $region42: #{tpu_custom_call.1} parent=38 // loop_header_branch
              %161 = sbr.rel (%p159) target = $region46
            $region43: #{tpu_custom_call.1} parent=38 // loop_body
              %v165 = vld [vmem:[%s163] sm:%s156]
              %166 = vst [vmem:[%s164] sm:%s156] %v165
            $region44: #{tpu_custom_call.1} parent=38 // loop_footer
              %s162 = sadd.s32 1, %s158
            $region45: #{tpu_custom_call.1} parent=38 // loop_footer_branch
              %157 = sbr.rel target = $region41
            $region46: #{tpu_custom_call.1} parent=38 // loop_exit
              _
          $region39: #{tpu_custom_call.1} parent=28 // pred_fallthru
            _
          // Predicated region
          $region58: #{tpu_custom_call.1} parent=28 // pred_check
            _
          $region59: #{tpu_custom_call.1} parent=28 // pred_check_branch
            %190 = sbr.rel (0) target = $region61
          $region60: #{tpu_custom_call.1} parent=28 // pred_region
            %191 = vsyncadd %s147, 16
          $region61: #{tpu_custom_call.1} parent=28 // pred_fallthru
            _
        $region29: #{tpu_custom_call.1} parent=23 // loop_footer
          %s142 = sadd.s32 1, %s138
        $region30: #{tpu_custom_call.1} parent=23 // loop_footer_branch
          %137 = sbr.rel target = $region26
        $region31: #{tpu_custom_call.1} parent=23 // loop_exit
          _
        loop: start=0, step=1, limit=8
        $region62: #{tpu_custom_call.1} parent=23 // loop_pre_header
          _
        $region63: #{tpu_custom_call.1} parent=23 // loop_header
          %s193 = sphi 0, %s197
          %p194 = scmp.ge.s32.totalorder %s193, 8
        $region64: #{tpu_custom_call.1} parent=23 // loop_header_branch
          %196 = sbr.rel (%p194) target = $region68
        $region65: #{tpu_custom_call.1} parent=23 // loop_body
          %s198 = scalar_lea.sflag [#allocation3], %s193
          %200 = dma.done %s198, 16
        $region66: #{tpu_custom_call.1} parent=23 // loop_footer
          %s197 = sadd.s32 1, %s193
        $region67: #{tpu_custom_call.1} parent=23 // loop_footer_branch
          %192 = sbr.rel target = $region63
        $region68: #{tpu_custom_call.1} parent=23 // loop_exit
          _
        %v201 = vld [vmem:[#allocation2] sm:$0xff]
        %v202 = vld [vmem:[%s133] sm:$0xff]
        %v203 = vadd.f32 %v201, %v202
        %vm204 = vcmask 261120
        %205 = vst.msk [vmem:[%s129] sm:$0xff] %vm204, %v203
        %s206 = sand.u32 %s71, 1
        %s207 = scalar_lea.sflag [#allocation7], %s206
        %s208 = sand.u32 %s71, 1
        %s209 = smul.addr %s208, 8
        %s210 = scalar_lea.vmem [#allocation6], %s209
        // Predicated region
        $region69: #{tpu_custom_call.1} parent=23 // pred_check
          %p211 = pneg %p81
        $region70: #{tpu_custom_call.1} parent=23 // pred_check_branch
          %213 = sbr.rel (%p211) target = $region72
        $region71: #{tpu_custom_call.1} parent=23 // pred_region
          %s215 = ssub.s32 128, 128
          %216 = vsyncadd %s207, %s215
          %s217 = sadd.s32 %s28, %s27
          %s218 = smul.addr %s217, 128
          %s219 = scalar_lea.hbm %s3, %s218
          %s221 = sshll.u32 %s210, 4
          %s222 = int_to_ptr.vmem [resolvable:$true] %s221
          %224 = dma.vmem_to_hbm [thread:$0]  %s222, 128, %s219, %s207
        $region72: #{tpu_custom_call.1} parent=23 // pred_fallthru
          _
      $region24: #{tpu_custom_call.1} parent=5 // pred_fallthru
        _
      %p225 = scmp.le.s32.totalorder 2, %s18
      // Predicated region
      $region73: #{tpu_custom_call.1} parent=5 // pred_check
        %p226 = pneg %p225
      $region74: #{tpu_custom_call.1} parent=5 // pred_check_branch
        %228 = sbr.rel (%p226) target = $region76
      $region75: #{tpu_custom_call.1} parent=5 // pred_region
        %s229 = ssub.s32 %s18, 2
        // Predicated region
        $region77: #{tpu_custom_call.1} parent=75 // pred_check
          %p230 = pneg %p87
        $region78: #{tpu_custom_call.1} parent=75 // pred_check_branch
          %232 = sbr.rel (%p230) target = $region80
        $region79: #{tpu_custom_call.1} parent=75 // pred_region
          %s233 = sand.u32 %s72, 1
          %s234 = scalar_lea.sflag [#allocation7], %s233
          %s235 = sand.u32 %s72, 1
          %s236 = smul.addr %s235, 8
          %s237 = scalar_lea.vmem [#allocation6], %s236
          %238 = dma.done %s234, 128
        $region80: #{tpu_custom_call.1} parent=75 // pred_fallthru
          _
      $region76: #{tpu_custom_call.1} parent=5 // pred_fallthru
        _
    $region6: #{tpu_custom_call.1} parent=1 // loop_footer
      %s22 = sadd.s32 1, %s18
    $region7: #{tpu_custom_call.1} parent=1 // loop_footer_branch
      %17 = sbr.rel target = $region3
    $region8: #{tpu_custom_call.1} parent=1 // loop_exit
      _
    %239 = vsyncpa [#allocation7], 1
    %s240 = scalar_lea.sflag [#allocation7], 1
    %241 = vsyncpa %s240, 1
  %242 = vsyncmov [#allocation3]
  %s243 = vpop.sfrf %242
  %p244 = scmp.eq.s32.totalorder %s243, 0
  %p245 = pneg %p244
  %247 = shalt.err (%p245)
  %s248 = scalar_lea.sflag [#allocation3], 1
  %249 = vsyncmov %s248
  %s250 = vpop.sfrf %249
  %p251 = scmp.eq.s32.totalorder %s250, 0
  %p252 = pneg %p251
  %254 = shalt.err (%p252)
  %s255 = scalar_lea.sflag [#allocation3], 2
  %256 = vsyncmov %s255
  %s257 = vpop.sfrf %256
  %p258 = scmp.eq.s32.totalorder %s257, 0
  %p259 = pneg %p258
  %261 = shalt.err (%p259)
  %s262 = scalar_lea.sflag [#allocation3], 3
  %263 = vsyncmov %s262
  %s264 = vpop.sfrf %263
  %p265 = scmp.eq.s32.totalorder %s264, 0
  %p266 = pneg %p265
  %268 = shalt.err (%p266)
  %s269 = scalar_lea.sflag [#allocation3], 4
  %270 = vsyncmov %s269
  %s271 = vpop.sfrf %270
  %p272 = scmp.eq.s32.totalorder %s271, 0
  %p273 = pneg %p272
  %275 = shalt.err (%p273)
  %s276 = scalar_lea.sflag [#allocation3], 5
  %277 = vsyncmov %s276
  %s278 = vpop.sfrf %277
  %p279 = scmp.eq.s32.totalorder %s278, 0
  %p280 = pneg %p279
  %282 = shalt.err (%p280)
  %s283 = scalar_lea.sflag [#allocation3], 6
  %284 = vsyncmov %s283
  %s285 = vpop.sfrf %284
  %p286 = scmp.eq.s32.totalorder %s285, 0
  %p287 = pneg %p286
  %289 = shalt.err (%p287)
  %s290 = scalar_lea.sflag [#allocation3], 7
  %291 = vsyncmov %s290
  %s292 = vpop.sfrf %291
  %p293 = scmp.eq.s32.totalorder %s292, 0
  %p294 = pneg %p293
  %296 = shalt.err (%p294)

</llo_original>
